<compile_context>
chip_gen: v6e
topology: v6e:2x2x1
jax: 0.10.0
libtpu: 0.0.40
codegen_flags: <defaults>
</compile_context>

<pallas_src>
import functools

import numpy as np
import jax
import jax.numpy as jnp
from jax.experimental import pallas as pl
from jax.experimental.pallas import tpu as pltpu

LANE = 128                      # lane tile (fixed)
VMEM_LIMIT = 32 * 1024 * 1024   # explicit: v5e's default scoped VMEM is only 16 MiB


def _tile_loss(pred_ref, tgt_ref, w_ref, scal_ref, *, beta, small_beta):
    """Elementwise smooth-L1 loss for one (tm, LANE) tile (f32 math)."""
    p = pred_ref[...].astype(jnp.float32)
    t = tgt_ref[...].astype(jnp.float32)
    n = jnp.abs(p - t)

    half_s = scal_ref[0]
    if small_beta:
        loss = n * scal_ref[1] + half_s                      # n / (2 e^s) + s/2
    else:
        c_quad = scal_ref[1]                                 # 1 / (4 e^s beta)
        lin_a = scal_ref[2]                                  # -k / beta
        lin_b = scal_ref[3]                                  # k + beta/(4 e^s) + s/2
        loss = jnp.where(n < beta, c_quad * n * n + half_s, lin_a * n + lin_b)

    if w_ref is not None:
        loss = loss * w_ref[...].astype(jnp.float32)
    return loss


def _reduce_tile(x):
    """(tm, LANE) f32 -> (8, LANE) partial sums (VPU adds, no cross-lane work)."""
    tm = x.shape[0]
    if tm % 8 == 0:
        if tm == 8:
            return x
        return x.reshape(tm // 8, 8, LANE).sum(axis=0)
    # Small / ragged single-block case (tm < 8 or tm not a multiple of 8).
    s = jnp.sum(x, axis=0, keepdims=True)                    # (1, LANE)
    sub = jax.lax.broadcasted_iota(jnp.int32, (8, LANE), 0)
    return jnp.where(sub == 0, s, 0.0)


def _partial_sum_kernel(*refs, beta, has_weight, small_beta):
    """One (tm, LANE) tile -> (8, LANE) partial sum of the (weighted) loss."""
    if has_weight:
        scal_ref, lv_ref, pred_ref, tgt_ref, w_ref, psum_ref = refs
    else:
        scal_ref, lv_ref, pred_ref, tgt_ref, psum_ref = refs
        w_ref = None

    i = pl.program_id(0)
    last = pl.num_programs(0) - 1
    loss = _tile_loss(pred_ref, tgt_ref, w_ref, scal_ref,
                      beta=beta, small_beta=small_beta)
    tm = pred_ref.shape[0]

    # Interior tiles are always fully valid: no mask work.
    @pl.when(i != last)
    def _():
        psum_ref[...] = _reduce_tile(loss)

    # Only the last tile can contain padding / ragged garbage: mask it with a
    # tile-LOCAL index (no int32 overflow even for huge tensors).
    @pl.when(i == last)
    def _():
        row = jax.lax.broadcasted_iota(jnp.int32, (tm, LANE), 0)
        col = jax.lax.broadcasted_iota(jnp.int32, (tm, LANE), 1)
        valid = (row * LANE + col) < lv_ref[0]
        psum_ref[...] = _reduce_tile(jnp.where(valid, loss, 0.0))


def _elementwise_kernel(*refs, beta, has_weight, small_beta):
    """One (tm, LANE) tile of the elementwise (optionally weighted) loss."""
    if has_weight:
        scal_ref, pred_ref, tgt_ref, w_ref, out_ref = refs
    else:
        scal_ref, pred_ref, tgt_ref, out_ref = refs
        w_ref = None
    loss = _tile_loss(pred_ref, tgt_ref, w_ref, scal_ref,
                      beta=beta, small_beta=small_beta)
    out_ref[...] = loss.astype(out_ref.dtype)


def _scalar_constants(smooth_l1_s, beta, small_beta):
    """Host-side scalar precompute (hoisted out of the kernel loop)."""
    s = smooth_l1_s.reshape(-1)[0].astype(jnp.float32)
    exp_s = jnp.exp(s)
    half_s = 0.5 * s
    if small_beta:
        # matches the torch beta < 1e-5 branch exactly: |d| / (2 e^s) + s/2
        return jnp.stack([half_s, 1.0 / (2.0 * exp_s)]).astype(jnp.float32)
    x = beta / jnp.sqrt(2.0 * exp_s)
    # stable log(1 - erf(x)) = log(erfc(x)) = log(2) + log_ndtr(-sqrt(2) * x)
    k = jnp.log(2.0) + jax.scipy.special.log_ndtr(-jnp.sqrt(2.0) * x)
    c_quad = 1.0 / (4.0 * exp_s * beta)
    lin_a = -k / beta
    lin_b = k + beta / (4.0 * exp_s) + half_s
    return jnp.stack([half_s, c_quad, lin_a, lin_b]).astype(jnp.float32)


def smooth_l1_loss_pallas(pred, target, smooth_l1_s, weight=None, *,
                          beta=1.0, reduction='mean', avg_factor=None,
                          loss_weight=1.0, loss_map_dtype=jnp.float32):
    assert beta > 0
    assert pred.shape == target.shape and pred.size > 0
    if reduction not in ('none', 'mean', 'sum'):
        raise ValueError(f'invalid reduction {reduction}')
    if avg_factor is not None and reduction == 'sum':
        raise ValueError('avg_factor can not be used with reduction="sum"')

    orig_shape = pred.shape
    n_elem = pred.size
    small_beta = bool(beta < 1e-5)

    # Weight handling: scalar weights fold into a final multiply (no HBM
    # stream); full-shape weights are streamed; other shapes fall back to a
    # broadcast (materialized) stream.
    post_scale = None
    w_full = None
    if weight is not None:
        weight = jnp.asarray(weight)
        if weight.size == 1:
            post_scale = weight.reshape(()).astype(jnp.float32)
        elif weight.shape == orig_shape:
            w_full = weight
        else:
            # TODO(synk): broadcast small per-channel/anchor weights in-kernel
            # instead of materializing the full-shape broadcast in HBM.
            w_full = jnp.broadcast_to(weight, orig_shape)
    has_weight = w_full is not None

    scal = _scalar_constants(smooth_l1_s, float(beta), small_beta)

    # Lane-dense (rows, 128) view.  The reshape is free (bitcast) when
    # n_elem % 128 == 0 (common case); only misaligned tails trigger a pad copy.
    rows = -(-n_elem // LANE)              # cdiv
    pad = rows * LANE - n_elem

    def to_slab(a):
        a = a.reshape(-1)
        if pad:
            a = jnp.pad(a, (0, pad))
        return a.reshape(rows, LANE)

    pred2 = to_slab(pred)                  # keep original dtype; cast in-kernel
    tgt2 = to_slab(target)
    w2 = to_slab(w_full) if has_weight else None

    # Tile rows: big tiles amortize the ~0.35us per-grid-step overhead (matters
    # most on v7x's ~3.2 TB/s HBM).  Worst case double-buffered VMEM:
    #   mean/sum, 2 streams, tm=8192 f32 -> 16 MiB
    #   'none'/weighted, 3-4 streams, tm=4096 f32 -> 12-16 MiB
    # all within the 32 MiB scoped limit requested below.
    max_tm = 8192 if (reduction != 'none' and not has_weight) else 4096
    tm = min(max_tm, rows)
    grid = -(-rows // tm)

    tile_spec = pl.BlockSpec((tm, LANE), lambda i: (i, 0))
    smem_spec = pl.BlockSpec(memory_space=pltpu.MemorySpace.SMEM)
    cparams = pltpu.CompilerParams(dimension_semantics=("parallel",),
                                   vmem_limit_bytes=VMEM_LIMIT)

    def nbytes(a):
        return int(a.size) * a.dtype.itemsize

    if reduction == 'none':
        in_specs = [smem_spec, tile_spec, tile_spec]
        args = [scal, pred2, tgt2]
        if has_weight:
            in_specs.append(tile_spec)
            args.append(w2)
        out_bytes = rows * LANE * np.dtype(loss_map_dtype).itemsize
        cost = pl.CostEstimate(flops=8 * rows * LANE, transcendentals=0,
                               bytes_accessed=sum(nbytes(a) for a in args[1:]) + out_bytes)
        loss_map = pl.pallas_call(
            functools.partial(_elementwise_kernel, beta=float(beta),
                              has_weight=has_weight, small_beta=small_beta),
            out_shape=jax.ShapeDtypeStruct((rows, LANE), loss_map_dtype),
            grid=(grid,),
            in_specs=in_specs,
            out_specs=tile_spec,
            compiler_params=cparams,
            cost_estimate=cost,
        )(*args)
        loss = loss_map.reshape(-1)
        if pad:
            loss = loss[:n_elem]
        loss = loss.reshape(orig_shape)
        if post_scale is not None:
            loss = loss * post_scale
        return loss_weight * loss

    # mean / sum path: reduce-only kernel, no full-size loss-map writeback.
    # Valid element count within the LAST tile (tile-local, fits int32 easily).
    last_valid = n_elem - (grid - 1) * tm * LANE
    lv_arr = jnp.array([last_valid], dtype=jnp.int32)
    in_specs = [smem_spec, smem_spec, tile_spec, tile_spec]
    args = [scal, lv_arr, pred2, tgt2]
    if has_weight:
        in_specs.append(tile_spec)
        args.append(w2)
    out_bytes = grid * 8 * LANE * 4
    cost = pl.CostEstimate(flops=8 * rows * LANE, transcendentals=0,
                           bytes_accessed=sum(nbytes(a) for a in args[2:]) + out_bytes)
    partials = pl.pallas_call(
        functools.partial(_partial_sum_kernel, beta=float(beta),
                          has_weight=has_weight, small_beta=small_beta),
        out_shape=jax.ShapeDtypeStruct((grid * 8, LANE), jnp.float32),
        grid=(grid,),
        in_specs=in_specs,
        out_specs=pl.BlockSpec((8, LANE), lambda i: (i, 0)),
        compiler_params=cparams,
        cost_estimate=cost,
    )(*args)
    loss_sum = jnp.sum(partials)           # tiny (grid*8, 128) reduce in XLA
    # TODO(synk): on single-TC chips (v5e/v6e) an "arbitrary"-grid VMEM-scratch
    # accumulator variant would save the extra XLA reduction dispatch.

    if reduction == 'mean':
        denom = jnp.float32(n_elem) if avg_factor is None else jnp.float32(avg_factor)
        loss = loss_sum / denom
    else:                                  # 'sum'
        loss = loss_sum
    if post_scale is not None:
        loss = loss * post_scale
    return loss_weight * loss


class SmoothL1Loss:
    """JAX/Pallas port of mmdet SmoothL1Loss (with learnable smooth_l1_s)."""

    def __init__(self, beta=1.0, reduction='mean', loss_weight=1.0):
        self.beta = beta
        self.reduction = reduction
        self.loss_weight = loss_weight
        # deterministic init, matches torch.ones(1, dtype=torch.float32)
        self.smooth_l1_s = jnp.ones((1,), dtype=jnp.float32)

    def __call__(self, pred, target, weight=None, avg_factor=None,
                 reduction_override=None):
        assert reduction_override in (None, 'none', 'mean', 'sum')
        reduction = reduction_override if reduction_override else self.reduction
        return smooth_l1_loss_pallas(
            pred, target, self.smooth_l1_s, weight,
            beta=self.beta, reduction=reduction, avg_factor=avg_factor,
            loss_weight=self.loss_weight)


def _reference_loss(pred, target, s, beta=1.0):
    """Pure-JAX reference of the elementwise loss (original torch formula)."""
    n = jnp.abs(pred - target)
    exp_s = jnp.exp(s)
    factor = 1.0 / (4.0 * exp_s)
    k = jnp.log(1.0 - jax.scipy.special.erf(beta / jnp.sqrt(2.0 * exp_s)))
    return jnp.where(n < beta,
                     factor * n * n / beta + 0.5 * s,
                     (-1.0 / beta) * k * n + k + factor * beta + 0.5 * s)


if __name__ == "__main__":
    key = jax.random.PRNGKey(0)
    k1, k2, k3 = jax.random.split(key, 3)

    # bbox-regression-like input: (2, 4, 16, 16) NCHW (2048 elems, lane-aligned)
    pred = jax.random.normal(k1, (2, 4, 16, 16), dtype=jnp.float32)
    target = jax.random.normal(k2, (2, 4, 16, 16), dtype=jnp.float32)

    loss_mod = SmoothL1Loss(beta=1.0, reduction='mean', loss_weight=1.0)
    out_mean = jax.block_until_ready(loss_mod(pred, target))
    out_none = jax.block_until_ready(loss_mod(pred, target, reduction_override='none'))

    ref_map = _reference_loss(pred, target, jnp.float32(1.0), beta=1.0)
    assert out_none.shape == pred.shape
    assert jnp.allclose(out_mean, jnp.mean(ref_map), rtol=1e-5, atol=1e-5), \
        (out_mean, jnp.mean(ref_map))
    assert jnp.allclose(out_none, ref_map, rtol=1e-4, atol=1e-5)

    # ragged shape (105 elems, not a multiple of 128) + full-shape weight + sum
    p2 = jax.random.normal(k3, (3, 5, 7), dtype=jnp.float32)
    t2 = jnp.zeros((3, 5, 7), dtype=jnp.float32)
    w2 = jnp.abs(jax.random.normal(k1, (3, 5, 7), dtype=jnp.float32))
    out_sum = jax.block_until_ready(
        loss_mod(p2, t2, weight=w2, reduction_override='sum'))
    ref_sum = jnp.sum(_reference_loss(p2, t2, jnp.float32(1.0), beta=1.0) * w2)
    assert jnp.allclose(out_sum, ref_sum, rtol=1e-5, atol=1e-4), (out_sum, ref_sum)

    print("KERNEL_OK")
</pallas_src>

<mosaic_0001>
module attributes {stable_mosaic.version = 11 : i64} {
  func.func @_partial_sum_kernel(%arg0: i32, %arg1: memref<4xf32, #tpu.memory_space<smem>>, %arg2: memref<1xi32, #tpu.memory_space<smem>>, %arg3: memref<16x128xf32, #tpu.memory_space<vmem>>, %arg4: memref<16x128xf32, #tpu.memory_space<vmem>>, %arg5: memref<8x128xf32, #tpu.memory_space<vmem>>) attributes {dimension_semantics = [#tpu.dimension_semantics<parallel>], iteration_bounds = array<i64: 1>, scalar_prefetch = 0 : i64, scratch_operands = 0 : i64, tpu.core_type = #tpu.core_type<tc>, window_params = [{transform_indices = @transform_0, window_bounds = array<i64: 4>}, {transform_indices = @transform_1, window_bounds = array<i64: 1>}, {transform_indices = @transform_2, window_bounds = array<i64: 16, 128>}, {transform_indices = @transform_3, window_bounds = array<i64: 16, 128>}, {transform_indices = @transform_4, window_bounds = array<i64: 8, 128>}]} {
    %c0 = arith.constant 0 : index
    %c0_0 = arith.constant 0 : index
    %0 = vector.load %arg3[%c0, %c0_0] : memref<16x128xf32, #tpu.memory_space<vmem>>, vector<16x128xf32>
    %c0_1 = arith.constant 0 : index
    %c0_2 = arith.constant 0 : index
    %1 = vector.load %arg4[%c0_1, %c0_2] : memref<16x128xf32, #tpu.memory_space<vmem>>, vector<16x128xf32>
    %2 = arith.subf %0, %1 : vector<16x128xf32>
    %3 = math.absf %2 : vector<16x128xf32>
    %c0_3 = arith.constant 0 : index
    %4 = memref.load %arg1[%c0_3] : memref<4xf32, #tpu.memory_space<smem>>
    %c1 = arith.constant 1 : index
    %5 = memref.load %arg1[%c1] : memref<4xf32, #tpu.memory_space<smem>>
    %c2 = arith.constant 2 : index
    %6 = memref.load %arg1[%c2] : memref<4xf32, #tpu.memory_space<smem>>
    %c3 = arith.constant 3 : index
    %7 = memref.load %arg1[%c3] : memref<4xf32, #tpu.memory_space<smem>>
    %cst = arith.constant 1.000000e+00 : f32
    %8 = vector.broadcast %cst : f32 to vector<16x128xf32>
    %9 = arith.cmpf olt, %3, %8 : vector<16x128xf32>
    %10 = vector.broadcast %5 : f32 to vector<16x128xf32>
    %11 = arith.mulf %10, %3 : vector<16x128xf32>
    %12 = arith.mulf %11, %3 : vector<16x128xf32>
    %13 = vector.broadcast %4 : f32 to vector<16x128xf32>
    %14 = arith.addf %12, %13 : vector<16x128xf32>
    %15 = vector.broadcast %6 : f32 to vector<16x128xf32>
    %16 = arith.mulf %15, %3 : vector<16x128xf32>
    %17 = vector.broadcast %7 : f32 to vector<16x128xf32>
    %18 = arith.addf %16, %17 : vector<16x128xf32>
    %19 = arith.select %9, %14, %18 : vector<16x128xi1>, vector<16x128xf32>
    %c0_i32 = arith.constant 0 : i32
    %20 = arith.cmpi ne, %arg0, %c0_i32 : i32
    %21 = arith.extui %20 : i1 to i32
    %c0_i32_4 = arith.constant 0 : i32
    %22 = arith.cmpi ne, %21, %c0_i32_4 : i32
    scf.if %22 {
      %26 = vector.shape_cast %19 : vector<16x128xf32> to vector<2x8x128xf32>
      %cst_7 = arith.constant dense<0.000000e+00> : vector<8x128xf32>
      %27 = vector.multi_reduction <add>, %26, %cst_7 [0] : vector<2x8x128xf32> to vector<8x128xf32>
      %c0_8 = arith.constant 0 : index
      %c0_9 = arith.constant 0 : index
      %28 = vector.load %arg5[%c0_8, %c0_9] : memref<8x128xf32, #tpu.memory_space<vmem>>, vector<8x128xf32>
      tpu.vector_store %arg5[%c0_8, %c0_9], %27 {strides = array<i32>} : memref<8x128xf32, #tpu.memory_space<vmem>>, vector<8x128xf32>,
    } else {
    }
    %c0_i32_5 = arith.constant 0 : i32
    %23 = arith.cmpi eq, %arg0, %c0_i32_5 : i32
    %24 = arith.extui %23 : i1 to i32
    %c0_i32_6 = arith.constant 0 : i32
    %25 = arith.cmpi ne, %24, %c0_i32_6 : i32
    scf.if %25 {
      %26 = tpu.iota {dimensions = array<i32: 0>} : vector<16x128xi32>
      %27 = tpu.iota {dimensions = array<i32: 1>} : vector<16x128xi32>
      %c128_i32 = arith.constant 128 : i32
      %28 = vector.broadcast %c128_i32 : i32 to vector<16x128xi32>
      %29 = arith.muli %26, %28 : vector<16x128xi32>
      %30 = arith.addi %29, %27 : vector<16x128xi32>
      %c0_7 = arith.constant 0 : index
      %31 = memref.load %arg2[%c0_7] : memref<1xi32, #tpu.memory_space<smem>>
      %32 = vector.broadcast %31 : i32 to vector<16x128xi32>
      %33 = arith.cmpi slt, %30, %32 : vector<16x128xi32>
      %cst_8 = arith.constant 0.000000e+00 : f32
      %34 = vector.broadcast %cst_8 : f32 to vector<16x128xf32>
      %35 = arith.select %33, %19, %34 : vector<16x128xi1>, vector<16x128xf32>
      %36 = vector.shape_cast %35 : vector<16x128xf32> to vector<2x8x128xf32>
      %cst_9 = arith.constant dense<0.000000e+00> : vector<8x128xf32>
      %37 = vector.multi_reduction <add>, %36, %cst_9 [0] : vector<2x8x128xf32> to vector<8x128xf32>
      %c0_10 = arith.constant 0 : index
      %c0_11 = arith.constant 0 : index
      %38 = vector.load %arg5[%c0_10, %c0_11] : memref<8x128xf32, #tpu.memory_space<vmem>>, vector<8x128xf32>
      tpu.vector_store %arg5[%c0_10, %c0_11], %37 {strides = array<i32>} : memref<8x128xf32, #tpu.memory_space<vmem>>, vector<8x128xf32>,
    } else {
    }
    return
  }
  func.func @transform_0(%arg0: i32) -> i32 {
    %c0_i32 = arith.constant 0 : i32
    %c0_i32_0 = arith.constant 0 : i32
    return %c0_i32 : i32
  }
  func.func @transform_1(%arg0: i32) -> i32 {
    %c0_i32 = arith.constant 0 : i32
    %c0_i32_0 = arith.constant 0 : i32
    return %c0_i32 : i32
  }
  func.func @transform_2(%arg0: i32) -> (i32, i32) {
    %c0_i32 = arith.constant 0 : i32
    %c0_i32_0 = arith.constant 0 : i32
    return %arg0, %c0_i32 : i32, i32
  }
  func.func @transform_3(%arg0: i32) -> (i32, i32) {
    %c0_i32 = arith.constant 0 : i32
    %c0_i32_0 = arith.constant 0 : i32
    return %arg0, %c0_i32 : i32, i32
  }
  func.func @transform_4(%arg0: i32) -> (i32, i32) {
    %c0_i32 = arith.constant 0 : i32
    %c0_i32_0 = arith.constant 0 : i32
    return %arg0, %c0_i32 : i32, i32
  }
}

</mosaic_0001>

<llo_original>
// kernel: tpu_custom_call.1
$region0: #{tpu_custom_call.1}
  #allocation0 [shape = 'u32[]', space=smem, size = 0x4, offset = 0x4, fixed_abs, tag = 'smem constant byte address 0x4 - core index']
  #allocation1 [shape = 'u32[144,128]{1,0:T(1,128)}', space=vmem, size = 0x12000, scoped, tag = 'internal scratch']
  #allocation2 [shape = 's32[1]{0:T(128)S(6)}', space=smem, size = 0x200, scoped, tag = 'scoped memory for tpu_custom_call.1']
  %s0 = inlined_call_operand.vmem [shape: f32[4], index: 0, kind: input, shape index: {}]
  %s1 = inlined_call_operand.<no memory space> [shape: s32[1], index: 1, kind: input, shape index: {}]
  %s2 = inlined_call_operand.hbm [shape: f32[16,128], index: 2, kind: input, shape index: {}]
  %s3 = inlined_call_operand.hbm [shape: f32[16,128], index: 3, kind: input, shape index: {}]
  %s4 = inlined_call_operand.hbm [shape: f32[8,128], index: 4, kind: output, shape index: {}]
  %s5 = sld [smem:[#allocation0]]
  $region46: #{tpu_custom_call.1} parent=0
    _
  %s7 = ssub.s32 1, %s5
  %s8 = scalar_select 0, %s7, %s5
  %9 = sst [smem:[#allocation2]] %s1
  $region1: #{tpu_custom_call.1} parent=0
    #allocation3 [shape = 'u8[512]{0}', space=smem, size = 0x200, scoped, tag = 'input window, operand 0, single buffered']
    #allocation4 [shape = 's32[1]{0}', space=sflag, size = 0x4, scoped, tag = 'scoped memory for tpu_custom_call.1']
    #allocation5 [shape = 's32[1]{0}', space=sflag, size = 0x4, scoped, tag = 'scoped memory for tpu_custom_call.1']
    #allocation6 [shape = 's32[1]{0}', space=sflag, size = 0x4, scoped, tag = 'scoped memory for tpu_custom_call.1']
    #allocation7 [shape = 'u8[8192]{0}', space=vmem, size = 0x2000, scoped, tag = 'input window, operand 2, single buffered']
    #allocation8 [shape = 'u8[8192]{0}', space=vmem, size = 0x2000, scoped, tag = 'input window, operand 3, single buffered']
    #allocation9 [shape = 's32[1]{0}', space=sflag, size = 0x4, scoped, tag = 'scoped memory for tpu_custom_call.1']
    #allocation10 [shape = 'u8[4096]{0}', space=vmem, size = 0x1000, scoped, tag = 'output window, operand 0, single buffered']
    %10 = vsyncpa [#allocation6], 0
    %11 = vsyncpa [#allocation4], 0
    %12 = vsyncpa [#allocation9], 0
    %13 = vsyncpa [#allocation5], 0
    // Predicated region
    $region2: #{tpu_custom_call.1} parent=1 // pred_check
      _
    $region3: #{tpu_custom_call.1} parent=1 // pred_check_branch
      %15 = sbr.rel (0) target = $region5
    $region4: #{tpu_custom_call.1} parent=1 // pred_region
      %s17 = ssub.s32 16, 16
      %18 = vsyncadd [#allocation6], %s17
      %s20 = sshll.u32 %s0, 4
      %s21 = int_to_ptr.vmem [resolvable:$true] %s20
      %23 = dma.vmem_to_smem %s21, 16, [#allocation3], [#allocation6]
    $region5: #{tpu_custom_call.1} parent=1 // pred_fallthru
      _
    // Predicated region
    $region6: #{tpu_custom_call.1} parent=1 // pred_check
      _
    $region7: #{tpu_custom_call.1} parent=1 // pred_check_branch
      %25 = sbr.rel (0) target = $region9
    $region8: #{tpu_custom_call.1} parent=1 // pred_region
      _
    $region9: #{tpu_custom_call.1} parent=1 // pred_fallthru
      _
    // Predicated region
    $region10: #{tpu_custom_call.1} parent=1 // pred_check
      _
    $region11: #{tpu_custom_call.1} parent=1 // pred_check_branch
      %27 = sbr.rel (0) target = $region13
    $region12: #{tpu_custom_call.1} parent=1 // pred_region
      %s29 = ssub.s32 256, 256
      %30 = vsyncadd [#allocation4], %s29
      %s31 = sshll.u32 [#allocation7], 4
      %s32 = int_to_ptr.vmem [resolvable:$true] %s31
      %37 = dma.hbm_to_vmem [thread:$0]  %s2, 256, %s32, [#allocation4], 128, 128, 8
    $region13: #{tpu_custom_call.1} parent=1 // pred_fallthru
      _
    // Predicated region
    $region14: #{tpu_custom_call.1} parent=1 // pred_check
      _
    $region15: #{tpu_custom_call.1} parent=1 // pred_check_branch
      %39 = sbr.rel (0) target = $region17
    $region16: #{tpu_custom_call.1} parent=1 // pred_region
      %s41 = ssub.s32 256, 256
      %42 = vsyncadd [#allocation9], %s41
      %s43 = sshll.u32 [#allocation8], 4
      %s44 = int_to_ptr.vmem [resolvable:$true] %s43
      %49 = dma.hbm_to_vmem [thread:$0]  %s3, 256, %s44, [#allocation9], 128, 128, 8
    $region17: #{tpu_custom_call.1} parent=1 // pred_fallthru
      _
    // Predicated region
    $region18: #{tpu_custom_call.1} parent=1 // pred_check
      _
    $region19: #{tpu_custom_call.1} parent=1 // pred_check_branch
      %51 = sbr.rel (0) target = $region21
    $region20: #{tpu_custom_call.1} parent=1 // pred_region
      %52 = dma.done [#allocation6], 16
    $region21: #{tpu_custom_call.1} parent=1 // pred_fallthru
      _
    // Predicated region
    $region22: #{tpu_custom_call.1} parent=1 // pred_check
      _
    $region23: #{tpu_custom_call.1} parent=1 // pred_check_branch
      %54 = sbr.rel (0) target = $region25
    $region24: #{tpu_custom_call.1} parent=1 // pred_region
      %55 = dma.done [#allocation4], 256
    $region25: #{tpu_custom_call.1} parent=1 // pred_fallthru
      _
    // Predicated region
    $region26: #{tpu_custom_call.1} parent=1 // pred_check
      _
    $region27: #{tpu_custom_call.1} parent=1 // pred_check_branch
      %57 = sbr.rel (0) target = $region29
    $region28: #{tpu_custom_call.1} parent=1 // pred_region
      %58 = dma.done [#allocation9], 256
    $region29: #{tpu_custom_call.1} parent=1 // pred_fallthru
      _
    %59 = sfence
    %v60 = vld [vmem:[#allocation7] sm:$0xff]
    %v61 = vld [vmem:[#allocation7 + $0x8] sm:$0xff]
    %v62 = vld [vmem:[#allocation8] sm:$0xff]
    %v63 = vld [vmem:[#allocation8 + $0x8] sm:$0xff]
    %v64 = vsub.f32 %v60, %v62
    %v65 = vsub.f32 %v61, %v63
    %v66 = vand.u32 2147483647, %v64
    %v67 = vand.u32 2147483647, %v65
    %s68 = sld [smem:[#allocation3]]
    %s69 = sld [smem:[#allocation3 + $0x1]]
    %s70 = sld [smem:[#allocation3 + $0x2]]
    %s71 = sld [smem:[#allocation3 + $0x3]]
    %vm72 = vcmp.lt.f32.partialorder %v66, 1.0
    %vm73 = vcmp.lt.f32.partialorder %v67, 1.0
    %v74 = vstv %s69
    %v75 = vmul.f32 %v74, %v66
    %v76 = vmul.f32 %v74, %v67
    %v77 = vmul.f32 %v75, %v66
    %v78 = vmul.f32 %v76, %v67
    %v79 = vstv %s68
    %v80 = vadd.f32 %v77, %v79
    %v81 = vadd.f32 %v78, %v79
    %v82 = vstv %s70
    %v83 = vmul.f32 %v82, %v66
    %v84 = vmul.f32 %v82, %v67
    %v85 = vstv %s71
    %v86 = vadd.f32 %v83, %v85
    %v87 = vadd.f32 %v84, %v85
    %v88 = vsel %vm72, %v80, %v86
    %v89 = vsel %vm73, %v81, %v87
    %p90 = scmp.ne.s32.totalorder 0, 0
    // Predicated region
    $region30: #{tpu_custom_call.1} parent=1 // pred_check
      %p91 = pneg %p90
    $region31: #{tpu_custom_call.1} parent=1 // pred_check_branch
      %93 = sbr.rel (%p91) target = $region33
    $region32: #{tpu_custom_call.1} parent=1 // pred_region
      %v94 = vadd.f32 %v88, %v89
      %95 = vst [vmem:[#allocation10] sm:$0xff] %v94
    $region33: #{tpu_custom_call.1} parent=1 // pred_fallthru
      _
    %p96 = scmp.eq.s32.totalorder 0, 0
    // Predicated region
    $region34: #{tpu_custom_call.1} parent=1 // pred_check
      %p97 = pneg %p96
    $region35: #{tpu_custom_call.1} parent=1 // pred_check_branch
      %99 = sbr.rel (%p97) target = $region37
    $region36: #{tpu_custom_call.1} parent=1 // pred_region
      %v100 = vlaneseq
      %v101 = vshrl.u32 %v100, 7
      %v102 = vadd.s32 %v101, 8
      %v103 = vlaneseq
      %v104 = vand.u32 %v103, 127
      %v105 = vmul.u32 %v101, 128
      %v106 = vmul.u32 %v102, 128
      %v107 = vadd.s32 %v105, %v104
      %v108 = vadd.s32 %v106, %v104
      %s109 = sld [smem:[#allocation2]]
      %v110 = vstv %s109
      %vm111 = vcmp.lt.s32.totalorder %v107, %v110
      %vm112 = vcmp.lt.s32.totalorder %v108, %v110
      %v113 = vsel %vm111, %v88, 0.0
      %v114 = vsel %vm112, %v89, 0.0
      %v115 = vadd.f32 %v113, %v114
      %116 = vst [vmem:[#allocation10] sm:$0xff] %v115
    $region37: #{tpu_custom_call.1} parent=1 // pred_fallthru
      _
    // Predicated region
    $region38: #{tpu_custom_call.1} parent=1 // pred_check
      _
    $region39: #{tpu_custom_call.1} parent=1 // pred_check_branch
      %118 = sbr.rel (0) target = $region41
    $region40: #{tpu_custom_call.1} parent=1 // pred_region
      %s120 = ssub.s32 128, 128
      %121 = vsyncadd [#allocation5], %s120
      %s123 = sshll.u32 [#allocation10], 4
      %s124 = int_to_ptr.vmem [resolvable:$true] %s123
      %126 = dma.vmem_to_hbm [thread:$0]  %s124, 128, %s4, [#allocation5]
    $region41: #{tpu_custom_call.1} parent=1 // pred_fallthru
      _
    // Predicated region
    $region42: #{tpu_custom_call.1} parent=1 // pred_check
      _
    $region43: #{tpu_custom_call.1} parent=1 // pred_check_branch
      %128 = sbr.rel (0) target = $region45
    $region44: #{tpu_custom_call.1} parent=1 // pred_region
      %129 = dma.done [#allocation5], 128
    $region45: #{tpu_custom_call.1} parent=1 // pred_fallthru
      _
    %130 = vsyncpa [#allocation4], 1
    %131 = vsyncpa [#allocation9], 1
    %132 = vsyncpa [#allocation5], 1
    %133 = vsyncpa [#allocation6], 1

</llo_original>
